<compile_context>
chip_gen: v7x
topology: tpu7x:2x2x1
jax: 0.10.0
libtpu: 0.0.40
codegen_flags: <defaults>
</compile_context>

<pallas_src>
import jax
import jax.numpy as jnp
from jax.experimental import pallas as pl
from jax.experimental.pallas import tpu as pltpu


def _round_up(x, m):
    return ((x + m - 1) // m) * m


def _pick_tile(total, target, granule):
    """Largest multiple of `granule` <= target that divides `total`.

    `total` is assumed to already be a multiple of `granule`.  If the whole
    extent fits under `target`, use it directly (single tile along that axis).
    """
    if total <= target:
        return total
    cand = (target // granule) * granule
    while cand >= granule:
        if total % cand == 0:
            return cand
        cand -= granule
    return granule


# ---------------------------------------------------------------------------
# Kernels
# ---------------------------------------------------------------------------

def _mcm_head_nk1_kernel(x_ref, w_ref, b_ref, o_ref):
    # Single K tile: no accumulator scratch, no pl.when.
    # x_ref: [TB, TK] bf16, w_ref: [TK, TC] bf16, b_ref: [1, TC] f32,
    # o_ref: [TB, TC] f32.
    o_ref[...] = jnp.tanh(
        jnp.dot(x_ref[...], w_ref[...], preferred_element_type=jnp.float32)
        + b_ref[...]
    ).astype(o_ref.dtype)


def _mcm_head_kernel(x_ref, w_ref, b_ref, o_ref, acc_ref):
    # Multi-K-tile path: f32 VMEM accumulator resident across the K axis.
    k = pl.program_id(2)

    @pl.when(k == 0)
    def _():
        acc_ref[...] = jnp.zeros_like(acc_ref)

    acc_ref[...] += jnp.dot(
        x_ref[...], w_ref[...], preferred_element_type=jnp.float32
    )

    @pl.when(k == pl.num_programs(2) - 1)
    def _():
        # Epilogue once per output tile: bias-add (VPU) + tanh (EUP) in f32.
        o_ref[...] = jnp.tanh(acc_ref[...] + b_ref[...]).astype(o_ref.dtype)


# ---------------------------------------------------------------------------
# Wrapper
# ---------------------------------------------------------------------------

def prepare_mcm_head_params(weight, bias):
    """One-time pad + bf16 cast of the (constant) head parameters.

    weight: [H, C] float32,  bias: [C] float32.
    Padding is to 128 only (independent of tile choices), so prepared params
    work for any batch size / tile configuration.
    """
    H, C = weight.shape
    assert bias.shape == (C,)
    H_pad = _round_up(H, 128)
    C_pad = _round_up(C, 128)
    w_p = jnp.pad(weight, ((0, H_pad - H), (0, C_pad - C))).astype(jnp.bfloat16)
    b_p = jnp.pad(bias, (0, C_pad - C)).astype(jnp.float32).reshape(1, C_pad)
    return {"weight": w_p, "bias": b_p, "hidden_size": H, "num_classes": C}


def mcm_classification_head(hidden, params):
    """tanh(hidden @ W + b) via a tiled, pipelined Pallas kernel.

    hidden: [B, H] float32.  `params` from `prepare_mcm_head_params`.
    Returns [B, C] float32.
    """
    B, H = hidden.shape
    assert H == params["hidden_size"]
    w_p = params["weight"]
    b_p = params["bias"]
    C = params["num_classes"]
    H_pad, C_pad = w_p.shape

    # Batch padded to a multiple of 16 (bf16: 2 rows per sublane).
    B_pad = _round_up(B, 16)
    x_p = jnp.pad(hidden, ((0, B_pad - B), (0, H_pad - H))).astype(jnp.bfloat16)

    # --- tile sizes ---
    # Targets chosen so the worst-case footprint (2x-buffered bf16 hidden +
    # weight, 2x-buffered f32 out, f32 acc) is ~18 MiB << 32 MiB scoped VMEM on
    # all of v5e / v6e / v7x.  TB is maximized first so nb == 1 whenever
    # possible and the weight matrix is streamed from HBM exactly once.
    TB = _pick_tile(B_pad, 1024, 16)    # batch   (sublane axis)
    TC = _pick_tile(C_pad, 512, 128)    # classes (lane axis)
    TK = _pick_tile(H_pad, 2048, 128)   # hidden  (reduction axis, divides H_pad)

    nb = B_pad // TB
    nc = C_pad // TC
    nk = H_pad // TK

    vmem_limit = 32 * 1024 * 1024
    out_shape = jax.ShapeDtypeStruct((B_pad, C_pad), jnp.float32)

    if nk == 1:
        # Fast path: whole reduction in one tile — no scratch, no pl.when.
        out_padded = pl.pallas_call(
            _mcm_head_nk1_kernel,
            out_shape=out_shape,
            grid=(nc, nb),
            in_specs=[
                pl.BlockSpec((TB, TK), lambda j, i: (i, 0)),   # hidden
                pl.BlockSpec((TK, TC), lambda j, i: (0, j)),   # weight
                pl.BlockSpec((1, TC), lambda j, i: (0, j)),    # bias
            ],
            out_specs=pl.BlockSpec((TB, TC), lambda j, i: (i, j)),
            compiler_params=pltpu.CompilerParams(
                dimension_semantics=("parallel", "parallel"),
                vmem_limit_bytes=vmem_limit,
            ),
        )(x_p, w_p, b_p)
    else:
        # General path: K innermost + "arbitrary" so the f32 accumulator stays
        # resident in VMEM across the reduction.
        out_padded = pl.pallas_call(
            _mcm_head_kernel,
            out_shape=out_shape,
            grid=(nc, nb, nk),
            in_specs=[
                pl.BlockSpec((TB, TK), lambda j, i, k: (i, k)),   # hidden
                pl.BlockSpec((TK, TC), lambda j, i, k: (k, j)),   # weight
                pl.BlockSpec((1, TC), lambda j, i, k: (0, j)),    # bias
            ],
            out_specs=pl.BlockSpec((TB, TC), lambda j, i, k: (i, j)),
            scratch_shapes=[pltpu.VMEM((TB, TC), jnp.float32)],
            compiler_params=pltpu.CompilerParams(
                dimension_semantics=("parallel", "parallel", "arbitrary"),
                vmem_limit_bytes=vmem_limit,
            ),
        )(x_p, w_p, b_p)

    return out_padded[:B, :C]


# ---------------------------------------------------------------------------
# References
# ---------------------------------------------------------------------------

def reference_f32(hidden, weight, bias):
    return jnp.tanh(hidden @ weight + bias[None, :])


def reference_bf16_inputs(hidden, weight, bias):
    # Matches the kernel's numerics: bf16 operands, f32 accumulate/bias/tanh.
    xh = hidden.astype(jnp.bfloat16).astype(jnp.float32)
    wh = weight.astype(jnp.bfloat16).astype(jnp.float32)
    return jnp.tanh(xh @ wh + bias[None, :])


if __name__ == "__main__":
    key = jax.random.PRNGKey(0)

    # ---- small demo shape (single-block fast path: nb = nc = nk = 1) ----
    k_x, k_w, k_b = jax.random.split(key, 3)
    B, H, C = 8, 32, 8
    hidden = jax.random.normal(k_x, (B, H), dtype=jnp.float32)
    weight = jax.random.normal(k_w, (H, C), dtype=jnp.float32) * 0.1
    bias = jax.random.normal(k_b, (C,), dtype=jnp.float32) * 0.1

    params = prepare_mcm_head_params(weight, bias)   # hoisted pad + bf16 cast
    out = mcm_classification_head(hidden, params)
    out = jax.block_until_ready(out)

    assert out.shape == (B, C)
    ref_bf16 = reference_bf16_inputs(hidden, weight, bias)
    assert jnp.allclose(out, ref_bf16, atol=1e-3, rtol=1e-3), \
        "mismatch vs bf16-input reference (small shape)"
    ref_f32 = reference_f32(hidden, weight, bias)
    assert jnp.allclose(out, ref_f32, atol=2e-2, rtol=2e-2), \
        "mismatch vs f32 reference (small shape)"

    # ---- modest shape exercising the multi-K-tile accumulator path ----
    k_x2, k_w2, k_b2 = jax.random.split(jax.random.PRNGKey(1), 3)
    B2, H2, C2 = 16, 2304, 12   # H_pad=2304 -> TK=1152, nk=2
    hidden2 = jax.random.normal(k_x2, (B2, H2), dtype=jnp.float32)
    weight2 = jax.random.normal(k_w2, (H2, C2), dtype=jnp.float32) * 0.02
    bias2 = jax.random.normal(k_b2, (C2,), dtype=jnp.float32) * 0.1

    params2 = prepare_mcm_head_params(weight2, bias2)
    out2 = mcm_classification_head(hidden2, params2)
    out2 = jax.block_until_ready(out2)

    assert out2.shape == (B2, C2)
    ref2 = reference_bf16_inputs(hidden2, weight2, bias2)
    assert jnp.allclose(out2, ref2, atol=2e-3, rtol=2e-3), \
        "mismatch vs bf16-input reference (multi-K shape)"

    print("KERNEL_OK")
</pallas_src>

<mosaic_0001>
module attributes {stable_mosaic.version = 11 : i64} {
  func.func @_mcm_head_nk1_kernel(%arg0: i32, %arg1: i32, %arg2: memref<16x128xbf16, #tpu.memory_space<vmem>>, %arg3: memref<128x128xbf16, #tpu.memory_space<vmem>>, %arg4: memref<1x128xf32, #tpu.memory_space<vmem>>, %arg5: memref<16x128xf32, #tpu.memory_space<vmem>>) attributes {dimension_semantics = [#tpu.dimension_semantics<parallel>, #tpu.dimension_semantics<parallel>], iteration_bounds = array<i64: 1, 1>, scalar_prefetch = 0 : i64, scratch_operands = 0 : i64, tpu.core_type = #tpu.core_type<tc>, window_params = [{transform_indices = @transform_0, window_bounds = array<i64: 16, 128>}, {transform_indices = @transform_1, window_bounds = array<i64: 128, 128>}, {transform_indices = @transform_2, window_bounds = array<i64: 1, 128>}, {transform_indices = @transform_3, window_bounds = array<i64: 16, 128>}]} {
    %c0 = arith.constant 0 : index
    %c0_0 = arith.constant 0 : index
    %0 = vector.load %arg2[%c0, %c0_0] : memref<16x128xbf16, #tpu.memory_space<vmem>>, vector<16x128xbf16>
    %c0_1 = arith.constant 0 : index
    %c0_2 = arith.constant 0 : index
    %1 = vector.load %arg3[%c0_1, %c0_2] : memref<128x128xbf16, #tpu.memory_space<vmem>>, vector<128x128xbf16>
    %cst = arith.constant dense<0.000000e+00> : vector<16x128xf32>
    %2 = tpu.matmul %0, %1, %cst {dimension_numbers = #tpu.dot_dimension_numbers<[1], [0], [0], [1], [0, 0, 1, 1], [], []>} : vector<16x128xbf16>, vector<128x128xbf16>, vector<16x128xf32> -> vector<16x128xf32>
    %c0_3 = arith.constant 0 : index
    %c0_4 = arith.constant 0 : index
    %3 = vector.load %arg4[%c0_3, %c0_4] : memref<1x128xf32, #tpu.memory_space<vmem>>, vector<1x128xf32>
    %4 = vector.broadcast %3 : vector<1x128xf32> to vector<16x128xf32>
    %5 = arith.addf %2, %4 : vector<16x128xf32>
    %6 = math.tanh %5 : vector<16x128xf32>
    %c0_5 = arith.constant 0 : index
    %c0_6 = arith.constant 0 : index
    %7 = vector.load %arg5[%c0_5, %c0_6] : memref<16x128xf32, #tpu.memory_space<vmem>>, vector<16x128xf32>
    tpu.vector_store %arg5[%c0_5, %c0_6], %6 {strides = array<i32>} : memref<16x128xf32, #tpu.memory_space<vmem>>, vector<16x128xf32>,
    return
  }
  func.func @transform_0(%arg0: i32, %arg1: i32) -> (i32, i32) {
    %c0_i32 = arith.constant 0 : i32
    %c0_i32_0 = arith.constant 0 : i32
    return %arg1, %c0_i32 : i32, i32
  }
  func.func @transform_1(%arg0: i32, %arg1: i32) -> (i32, i32) {
    %c0_i32 = arith.constant 0 : i32
    %c0_i32_0 = arith.constant 0 : i32
    return %c0_i32, %arg0 : i32, i32
  }
  func.func @transform_2(%arg0: i32, %arg1: i32) -> (i32, i32) {
    %c0_i32 = arith.constant 0 : i32
    %c0_i32_0 = arith.constant 0 : i32
    return %c0_i32, %arg0 : i32, i32
  }
  func.func @transform_3(%arg0: i32, %arg1: i32) -> (i32, i32) {
    %c0_i32 = arith.constant 0 : i32
    return %arg1, %arg0 : i32, i32
  }
}

</mosaic_0001>

<llo_original>
// kernel: tpu_custom_call.1
$region0: #{tpu_custom_call.1}
  #allocation0 [shape = 'u32[]', space=smem, size = 0x4, offset = 0x4, fixed_abs, tag = 'smem constant byte address 0x4 - core index']
  #allocation1 [shape = 'u32[144,128]{1,0:T(1,128)}', space=vmem, size = 0x12000, scoped, tag = 'internal scratch']
  %s0 = inlined_call_operand.hbm [shape: bf16[16,128], index: 0, kind: input, shape index: {}]
  %s1 = inlined_call_operand.hbm [shape: bf16[128,128], index: 1, kind: input, shape index: {}]
  %s2 = inlined_call_operand.vmem [shape: f32[1,128], index: 2, kind: input, shape index: {}]
  %s3 = inlined_call_operand.hbm [shape: f32[16,128], index: 3, kind: output, shape index: {}]
  %s4 = sld [smem:[#allocation0]]
  $region30: #{tpu_custom_call.1} parent=0
    _
  %s6 = ssub.s32 1, %s4
  %s7 = scalar_select 0, %s6, %s4
  $region1: #{tpu_custom_call.1} parent=0
    #allocation2 [shape = 'u8[4096]{0}', space=vmem, size = 0x1000, scoped, tag = 'input window, operand 0, single buffered']
    #allocation3 [shape = 's32[1]{0}', space=sflag, size = 0x4, scoped, tag = 'scoped memory for tpu_custom_call.1']
    #allocation4 [shape = 's32[1]{0}', space=sflag, size = 0x4, scoped, tag = 'scoped memory for tpu_custom_call.1']
    #allocation5 [shape = 'u8[32768]{0}', space=vmem, size = 0x8000, scoped, tag = 'input window, operand 1, single buffered']
    #allocation6 [shape = 's32[1]{0}', space=sflag, size = 0x4, scoped, tag = 'scoped memory for tpu_custom_call.1']
    #allocation7 [shape = 'u8[8192]{0}', space=vmem, size = 0x2000, scoped, tag = 'output window, operand 0, single buffered']
    %8 = vsyncpa [#allocation3], 0
    %9 = vsyncpa [#allocation6], 0
    %10 = vsyncpa [#allocation4], 0
    // Predicated region
    $region2: #{tpu_custom_call.1} parent=1 // pred_check
      _
    $region3: #{tpu_custom_call.1} parent=1 // pred_check_branch
      %12 = sbr.rel (0) target = $region5
    $region4: #{tpu_custom_call.1} parent=1 // pred_region
      %s14 = ssub.s32 128, 128
      %15 = vsyncadd [#allocation3], %s14
      %s16 = sshll.u32 [#allocation2], 4
      %s17 = int_to_ptr.vmem [resolvable:$true] %s16
      %22 = dma.hbm_to_vmem [thread:$0]  %s0, 128, %s17, [#allocation3], 64, 64, 4
    $region5: #{tpu_custom_call.1} parent=1 // pred_fallthru
      _
    // Predicated region
    $region6: #{tpu_custom_call.1} parent=1 // pred_check
      _
    $region7: #{tpu_custom_call.1} parent=1 // pred_check_branch
      %24 = sbr.rel (0) target = $region9
    $region8: #{tpu_custom_call.1} parent=1 // pred_region
      %s26 = ssub.s32 1024, 1024
      %27 = vsyncadd [#allocation6], %s26
      %s28 = sshll.u32 [#allocation5], 4
      %s29 = int_to_ptr.vmem [resolvable:$true] %s28
      %34 = dma.hbm_to_vmem [thread:$0]  %s1, 1024, %s29, [#allocation6], 64, 64, 4
    $region9: #{tpu_custom_call.1} parent=1 // pred_fallthru
      _
    // Predicated region
    $region10: #{tpu_custom_call.1} parent=1 // pred_check
      _
    $region11: #{tpu_custom_call.1} parent=1 // pred_check_branch
      %36 = sbr.rel (0) target = $region13
    $region12: #{tpu_custom_call.1} parent=1 // pred_region
      _
    $region13: #{tpu_custom_call.1} parent=1 // pred_fallthru
      _
    // Predicated region
    $region14: #{tpu_custom_call.1} parent=1 // pred_check
      _
    $region15: #{tpu_custom_call.1} parent=1 // pred_check_branch
      %38 = sbr.rel (0) target = $region17
    $region16: #{tpu_custom_call.1} parent=1 // pred_region
      %39 = dma.done [#allocation3], 128
    $region17: #{tpu_custom_call.1} parent=1 // pred_fallthru
      _
    // Predicated region
    $region18: #{tpu_custom_call.1} parent=1 // pred_check
      _
    $region19: #{tpu_custom_call.1} parent=1 // pred_check_branch
      %41 = sbr.rel (0) target = $region21
    $region20: #{tpu_custom_call.1} parent=1 // pred_region
      %42 = dma.done [#allocation6], 1024
    $region21: #{tpu_custom_call.1} parent=1 // pred_fallthru
      _
    %v44 = vld [vmem:[#allocation2] sm:$0xf]
    %v45 = vld [vmem:[#allocation2 + $0x4] sm:$0xf]
    %v46 = vld [vmem:[#allocation5] sm:$0xf]
    %v47 = vld [vmem:[#allocation5 + $0x4] sm:$0xf]
    %v48 = vld [vmem:[#allocation5 + $0x8] sm:$0xf]
    %v49 = vld [vmem:[#allocation5 + $0xc] sm:$0xf]
    %v50 = vld [vmem:[#allocation5 + $0x10] sm:$0xf]
    %v51 = vld [vmem:[#allocation5 + $0x14] sm:$0xf]
    %v52 = vld [vmem:[#allocation5 + $0x18] sm:$0xf]
    %v53 = vld [vmem:[#allocation5 + $0x1c] sm:$0xf]
    %v54 = vld [vmem:[#allocation5 + $0x20] sm:$0xf]
    %v55 = vld [vmem:[#allocation5 + $0x24] sm:$0xf]
    %v56 = vld [vmem:[#allocation5 + $0x28] sm:$0xf]
    %v57 = vld [vmem:[#allocation5 + $0x2c] sm:$0xf]
    %v58 = vld [vmem:[#allocation5 + $0x30] sm:$0xf]
    %v59 = vld [vmem:[#allocation5 + $0x34] sm:$0xf]
    %v60 = vld [vmem:[#allocation5 + $0x38] sm:$0xf]
    %v61 = vld [vmem:[#allocation5 + $0x3c] sm:$0xf]
    %v62 = vld [vmem:[%s2] sm:$0x1]
    %v64 = vlaneseq
    %v65 = vshrl.u32 %v64, 7
    %v66 = vsub.s32 0, %v65
    %v67 = vrot.slane %v62, %v66
    %v71 = vunpack.c.l.b16 %v44
    %v72 = vunpack.c.l.b16 %v45
    %v73 = vpack.c.b16 %v72, %v71
    %v91 = vunpack.c.l.b16 %v46
    %v92 = vunpack.c.l.b16 %v47
    %v93 = vunpack.c.l.b16 %v48
    %v94 = vunpack.c.l.b16 %v49
    %v95 = vunpack.c.l.b16 %v50
    %v96 = vunpack.c.l.b16 %v51
    %v97 = vunpack.c.l.b16 %v52
    %v98 = vunpack.c.l.b16 %v53
    %v99 = vunpack.c.l.b16 %v54
    %v100 = vunpack.c.l.b16 %v55
    %v101 = vunpack.c.l.b16 %v56
    %v102 = vunpack.c.l.b16 %v57
    %v103 = vunpack.c.l.b16 %v58
    %v104 = vunpack.c.l.b16 %v59
    %v105 = vunpack.c.l.b16 %v60
    %v106 = vunpack.c.l.b16 %v61
    %v107 = vpack.c.b16 %v92, %v91
    %v108 = vpack.c.b16 %v94, %v93
    %v109 = vpack.c.b16 %v96, %v95
    %v110 = vpack.c.b16 %v98, %v97
    %v111 = vpack.c.b16 %v100, %v99
    %v112 = vpack.c.b16 %v102, %v101
    %v113 = vpack.c.b16 %v104, %v103
    %v114 = vpack.c.b16 %v106, %v105
    %123 = vmatprep.subr.bf16.mxu0 0
    %124 = vmatpush1.bf16.msra.mxu0 %v107
    %125 = vmatprep.subr.bf16.mxu0 0
    %126 = vmatpush1.bf16.msra.mxu0 %v108
    %127 = vmatprep.subr.bf16.mxu0 0
    %128 = vmatpush1.bf16.msra.mxu0 %v109
    %129 = vmatprep.subr.bf16.mxu0 0
    %130 = vmatpush1.bf16.msra.mxu0 %v110
    %131 = vmatprep.subr.bf16.mxu0 0
    %132 = vmatpush1.bf16.msra.mxu0 %v111
    %133 = vmatprep.subr.bf16.mxu0 0
    %134 = vmatpush1.bf16.msra.mxu0 %v112
    %135 = vmatprep.subr.bf16.mxu0 0
    %136 = vmatpush1.bf16.msra.mxu0 %v113
    %137 = vmatprep.subr.bf16.mxu0 0
    %138 = vmatpush1.bf16.msra.mxu0 %v114
    %139 = vmatprep.subr.bf16.mxu0 0
    %140 = vmatpush1.bf16.msra.mxu0 0
    %141 = vmatprep.subr.bf16.mxu0 0
    %142 = vmatpush1.bf16.msra.mxu0 0
    %143 = vmatprep.subr.bf16.mxu0 0
    %144 = vmatpush1.bf16.msra.mxu0 0
    %145 = vmatprep.subr.bf16.mxu0 0
    %146 = vmatpush1.bf16.msra.mxu0 0
    %147 = vmatprep.subr.bf16.mxu0 0
    %148 = vmatpush1.bf16.msra.mxu0 0
    %149 = vmatprep.subr.bf16.mxu0 0
    %150 = vmatpush1.bf16.msra.mxu0 0
    %151 = vmatprep.subr.bf16.mxu0 0
    %152 = vmatpush1.bf16.msra.mxu0 0
    %153 = vmatprep.subr.bf16.mxu0 0
    %154 = vmatpush1.bf16.msra.mxu0 0
    %155 = vmatprep.mubr.bf16.mxu0 0
    %156 = vmatmul.mubr.bf16.gmra.mrb[0].mxu0 %v73
    %v157 = vpop.f32.mrb[0].mxu0
    %v158 = vadd.f32 %v67, %v157
    %v159 = vpop.f32.mrb[0].mxu0
    %v160 = vpop.f32.mrb[0].mxu0
    %v161 = vadd.f32 %v67, %v160
    %v162 = vpop.f32.mrb[0].mxu0
    %163 = vdwg.mxu0
    %v164 = vtanh.pop %v158
    %v165 = vtanh.pop %v161
    %166 = vst [vmem:[#allocation7] sm:$0xff] %v164
    %167 = vst [vmem:[#allocation7 + $0x8] sm:$0xff] %v165
    // Predicated region
    $region22: #{tpu_custom_call.1} parent=1 // pred_check
      _
    $region23: #{tpu_custom_call.1} parent=1 // pred_check_branch
      %169 = sbr.rel (0) target = $region25
    $region24: #{tpu_custom_call.1} parent=1 // pred_region
      %s171 = ssub.s32 256, 256
      %172 = vsyncadd [#allocation4], %s171
      %s173 = sshll.u32 [#allocation7], 4
      %s174 = int_to_ptr.vmem [resolvable:$true] %s173
      %179 = dma.vmem_to_hbm [thread:$0]  %s174, 256, %s3, [#allocation4], 128, 128, 8
    $region25: #{tpu_custom_call.1} parent=1 // pred_fallthru
      _
    // Predicated region
    $region26: #{tpu_custom_call.1} parent=1 // pred_check
      _
    $region27: #{tpu_custom_call.1} parent=1 // pred_check_branch
      %181 = sbr.rel (0) target = $region29
    $region28: #{tpu_custom_call.1} parent=1 // pred_region
      %182 = dma.done [#allocation4], 256
    $region29: #{tpu_custom_call.1} parent=1 // pred_fallthru
      _
    %183 = vsyncpa [#allocation3], 1
    %184 = vsyncpa [#allocation6], 1
    %185 = vsyncpa [#allocation4], 1

</llo_original>
